<compile_context>
chip_gen: v7x
topology: tpu7x:2x2x1
jax: 0.10.0
libtpu: 0.0.40
codegen_flags: <defaults>
</compile_context>

<pallas_src>
import functools

import jax
import jax.numpy as jnp
import numpy as np
from jax.experimental import pallas as pl
from jax.experimental.pallas import tpu as pltpu


def _round_up(x, m):
    return ((x + m - 1) // m) * m


# ---------------------------------------------------------------------------
# Fused GraphConv layer kernel:
#   out[m-tile, :] = sum_k A[m-tile, k-tile] @ (X[k-tile, :] @ W)  + b
# with optional dropout fused into the epilogue (used for layer 1).
# ---------------------------------------------------------------------------
def _graphconv_kernel(a_ref, x_ref, w_ref, b_ref, *rest,
                      keep_threshold, inv_keep_prob):
    if keep_threshold is None:
        o_ref, acc_ref = rest
        bits_ref = None
    else:
        bits_ref, o_ref, acc_ref = rest

    k = pl.program_id(1)

    @pl.when(k == 0)
    def _init():
        acc_ref[...] = jnp.zeros_like(acc_ref)

    # Small (tk, f_in) @ (f_in, f_out) matmul, then the dominant aggregation
    # matmul on bf16 operands with f32 accumulation on the MXU.
    xw = jnp.dot(x_ref[...], w_ref[...], preferred_element_type=jnp.float32)
    acc_ref[...] += jnp.dot(a_ref[...], xw.astype(jnp.bfloat16),
                            preferred_element_type=jnp.float32)

    @pl.when(k == pl.num_programs(1) - 1)
    def _finalize():
        h = acc_ref[...] + b_ref[...]
        if keep_threshold is not None:
            # keep iff bits >= p * 2^32   (P(keep) = 1 - p), inverted scaling.
            keep = bits_ref[...] >= jnp.uint32(keep_threshold)
            h = jnp.where(keep, h * inv_keep_prob, 0.0)
        o_ref[...] = h.astype(o_ref.dtype)


def graphconv(adj, x, w, b, rng_bits=None, dropout_p=0.0, *, tm=512, tk=512):
    """out = A_hat @ (x @ w) + b, optionally followed by fused dropout.

    Inputs must already be padded: adj (bf16) is [N, N] with N a multiple of
    the tile sizes; x is [N, f_in]; w is [f_in, f_out]; b is [f_out]; f_in and
    f_out are multiples of 128; rng_bits (uint32) is [N, f_out] if dropout_p>0.
    """
    n = adj.shape[0]
    f_in = x.shape[1]
    f_out = w.shape[1]
    tm = min(tm, n)
    tk = min(tk, n)
    assert n % tm == 0 and n % tk == 0
    grid = (n // tm, n // tk)

    in_specs = [
        pl.BlockSpec((tm, tk), lambda m, k: (m, k)),        # adjacency tile
        pl.BlockSpec((tk, f_in), lambda m, k: (k, 0)),      # node features
        pl.BlockSpec((f_in, f_out), lambda m, k: (0, 0)),   # weight (resident)
        pl.BlockSpec((1, f_out), lambda m, k: (0, 0)),      # bias   (resident)
    ]
    args = [adj, x, w, b.reshape(1, -1)]

    if dropout_p > 0.0:
        assert rng_bits is not None
        keep_threshold = min(int(round(dropout_p * 2.0 ** 32)), 2 ** 32 - 1)
        inv_keep_prob = 1.0 / (1.0 - dropout_p)
        in_specs.append(pl.BlockSpec((tm, f_out), lambda m, k: (m, 0)))
        args.append(rng_bits)
    else:
        keep_threshold = None
        inv_keep_prob = 1.0

    kernel = functools.partial(_graphconv_kernel,
                               keep_threshold=keep_threshold,
                               inv_keep_prob=inv_keep_prob)

    flops = 2 * n * n * f_out + 2 * n * f_in * f_out
    bytes_accessed = (adj.size * adj.dtype.itemsize
                      + x.size * x.dtype.itemsize
                      + w.size * w.dtype.itemsize
                      + n * f_out * 4)

    return pl.pallas_call(
        kernel,
        out_shape=jax.ShapeDtypeStruct((n, f_out), jnp.float32),
        grid=grid,
        in_specs=in_specs,
        out_specs=pl.BlockSpec((tm, f_out), lambda m, k: (m, 0)),
        scratch_shapes=[pltpu.VMEM((tm, f_out), jnp.float32)],
        compiler_params=pltpu.CompilerParams(
            dimension_semantics=("parallel", "arbitrary"),
            vmem_limit_bytes=32 * 1024 * 1024,
        ),
        cost_estimate=pl.CostEstimate(
            flops=flops, transcendentals=0, bytes_accessed=bytes_accessed),
    )(*args)


# ---------------------------------------------------------------------------
# GNNConv forward: GraphConv -> dropout -> GraphConv (no ReLU, as in reference)
# ---------------------------------------------------------------------------
def gnn_conv_forward(adj_hat, features, params, dropout_p, rng_key, *, tile=512):
    assert 0.0 <= dropout_p < 1.0
    n = adj_hat.shape[0]
    f_in = features.shape[1]
    hidden = params["w1"].shape[1]
    classes = params["w2"].shape[1]

    # Lane-dense padding: feature dims to multiples of 128, N to a tile multiple.
    n_tile = min(tile, _round_up(n, 128))
    n_pad = _round_up(n, n_tile)
    f_in_p = _round_up(f_in, 128)
    hid_p = _round_up(hidden, 128)
    cls_p = _round_up(classes, 128)

    adj_p = jnp.zeros((n_pad, n_pad), jnp.bfloat16)
    adj_p = adj_p.at[:n, :n].set(adj_hat.astype(jnp.bfloat16))
    x_p = jnp.zeros((n_pad, f_in_p), jnp.float32).at[:n, :f_in].set(features)
    w1_p = jnp.zeros((f_in_p, hid_p), jnp.float32).at[:f_in, :hidden].set(params["w1"])
    b1_p = jnp.zeros((hid_p,), jnp.float32).at[:hidden].set(params["b1"])
    w2_p = jnp.zeros((hid_p, cls_p), jnp.float32).at[:hidden, :classes].set(params["w2"])
    b2_p = jnp.zeros((cls_p,), jnp.float32).at[:classes].set(params["b2"])

    bits = None
    if dropout_p > 0.0:
        # TODO(synk): pltpu.prng_random_bits would generate these in-kernel on
        # real TPUs, but it does not lower on the CPU/interpret fallback, so the
        # mask bits are drawn with jax.random and the integer-threshold compare
        # is fused into the layer-1 epilogue instead.
        bits = jax.random.bits(rng_key, (n_pad, hid_p), dtype=jnp.uint32)

    h = graphconv(adj_p, x_p, w1_p, b1_p, rng_bits=bits, dropout_p=dropout_p,
                  tm=n_tile, tk=n_tile)
    logits = graphconv(adj_p, h, w2_p, b2_p, tm=n_tile, tk=n_tile)
    return logits[:n, :classes]


def glorot(key, shape):
    limit = jnp.sqrt(6.0 / (shape[0] + shape[1]))
    return jax.random.uniform(key, shape, jnp.float32, -limit, limit)


if __name__ == "__main__":
    # Small shapes implied by the module: N nodes, in_feats -> hidden -> classes.
    N, in_feats, hidden_size, num_classes, p = 64, 16, 32, 8, 0.1

    key = jax.random.PRNGKey(0)
    k_adj, k_x, k_w1, k_w2, k_drop = jax.random.split(key, 5)

    # Deterministic random graph: symmetric adjacency, no self loops,
    # symmetric GCN normalization A_hat = D^-1/2 A D^-1/2 (degree clamped >= 1).
    a = jax.random.bernoulli(k_adj, 0.2, (N, N)).astype(jnp.float32)
    a = jnp.maximum(a, a.T)
    a = a * (1.0 - jnp.eye(N, dtype=jnp.float32))
    deg = jnp.maximum(a.sum(axis=1), 1.0)
    d_inv_sqrt = 1.0 / jnp.sqrt(deg)
    adj_hat = a * d_inv_sqrt[:, None] * d_inv_sqrt[None, :]

    features = jax.random.normal(k_x, (N, in_feats), jnp.float32)

    params = {
        "w1": glorot(k_w1, (in_feats, hidden_size)),
        "b1": jnp.zeros((hidden_size,), jnp.float32),
        "w2": glorot(k_w2, (hidden_size, num_classes)),
        "b2": jnp.zeros((num_classes,), jnp.float32),
    }

    # Correctness check against a plain-JAX reference with dropout disabled
    # (loose tolerance: the kernel uses a bf16 adjacency / bf16 XW on the MXU).
    ref_h = adj_hat @ (features @ params["w1"]) + params["b1"]
    ref = adj_hat @ (ref_h @ params["w2"]) + params["b2"]
    out_nodrop = gnn_conv_forward(adj_hat, features, params, 0.0, k_drop)
    out_nodrop = jax.block_until_ready(out_nodrop)
    np.testing.assert_allclose(np.asarray(out_nodrop), np.asarray(ref),
                               rtol=5e-2, atol=5e-2)

    # Training-mode forward with dropout between the two GraphConv layers.
    logits = gnn_conv_forward(adj_hat, features, params, dropout_p=p,
                              rng_key=k_drop)
    logits = jax.block_until_ready(logits)
    assert logits.shape == (N, num_classes)
    assert bool(jnp.all(jnp.isfinite(logits)))
    print("KERNEL_OK")
</pallas_src>

<mosaic_0001>
module attributes {stable_mosaic.version = 11 : i64} {
  func.func @_graphconv_kernel(%arg0: i32, %arg1: i32, %arg2: memref<128x128xbf16, #tpu.memory_space<vmem>>, %arg3: memref<128x128xf32, #tpu.memory_space<vmem>>, %arg4: memref<128x128xf32, #tpu.memory_space<vmem>>, %arg5: memref<1x128xf32, #tpu.memory_space<vmem>>, %arg6: memref<128x128xf32, #tpu.memory_space<vmem>>, %arg7: memref<128x128xf32, #tpu.memory_space<vmem>>) attributes {dimension_semantics = [#tpu.dimension_semantics<parallel>, #tpu.dimension_semantics<arbitrary>], iteration_bounds = array<i64: 1, 1>, scalar_prefetch = 0 : i64, scratch_operands = 1 : i64, tpu.core_type = #tpu.core_type<tc>, window_params = [{transform_indices = @transform_0, window_bounds = array<i64: 128, 128>}, {transform_indices = @transform_1, window_bounds = array<i64: 128, 128>}, {pipeline_mode = #tpu.pipeline_mode<synchronous>, transform_indices = @transform_2, window_bounds = array<i64: 128, 128>}, {pipeline_mode = #tpu.pipeline_mode<synchronous>, transform_indices = @transform_3, window_bounds = array<i64: 1, 128>}, {transform_indices = @transform_4, window_bounds = array<i64: 128, 128>}]} {
    %c0_i32 = arith.constant 0 : i32
    %0 = arith.cmpi eq, %arg1, %c0_i32 : i32
    %1 = arith.extui %0 : i1 to i32
    %c0_i32_0 = arith.constant 0 : i32
    %2 = arith.cmpi ne, %1, %c0_i32_0 : i32
    scf.if %2 {
      %cst_13 = arith.constant 0.000000e+00 : f32
      %15 = vector.broadcast %cst_13 : f32 to vector<128x128xf32>
      %c0_14 = arith.constant 0 : index
      %c0_15 = arith.constant 0 : index
      %16 = vector.load %arg7[%c0_14, %c0_15] : memref<128x128xf32, #tpu.memory_space<vmem>>, vector<128x128xf32>
      tpu.vector_store %arg7[%c0_14, %c0_15], %15 {strides = array<i32>} : memref<128x128xf32, #tpu.memory_space<vmem>>, vector<128x128xf32>,
    } else {
    }
    %c0 = arith.constant 0 : index
    %c0_1 = arith.constant 0 : index
    %3 = vector.load %arg3[%c0, %c0_1] : memref<128x128xf32, #tpu.memory_space<vmem>>, vector<128x128xf32>
    %c0_2 = arith.constant 0 : index
    %c0_3 = arith.constant 0 : index
    %4 = vector.load %arg4[%c0_2, %c0_3] : memref<128x128xf32, #tpu.memory_space<vmem>>, vector<128x128xf32>
    %cst = arith.constant dense<0.000000e+00> : vector<128x128xf32>
    %5 = tpu.matmul %3, %4, %cst {dimension_numbers = #tpu.dot_dimension_numbers<[1], [0], [0], [1], [0, 0, 1, 1], [], []>} : vector<128x128xf32>, vector<128x128xf32>, vector<128x128xf32> -> vector<128x128xf32>
    %c0_4 = arith.constant 0 : index
    %c0_5 = arith.constant 0 : index
    %6 = vector.load %arg7[%c0_4, %c0_5] : memref<128x128xf32, #tpu.memory_space<vmem>>, vector<128x128xf32>
    %c0_6 = arith.constant 0 : index
    %c0_7 = arith.constant 0 : index
    %7 = vector.load %arg2[%c0_6, %c0_7] : memref<128x128xbf16, #tpu.memory_space<vmem>>, vector<128x128xbf16>
    %8 = arith.truncf %5 : vector<128x128xf32> to vector<128x128xbf16>
    %cst_8 = arith.constant dense<0.000000e+00> : vector<128x128xf32>
    %9 = tpu.matmul %7, %8, %cst_8 {dimension_numbers = #tpu.dot_dimension_numbers<[1], [0], [0], [1], [0, 0, 1, 1], [], []>} : vector<128x128xbf16>, vector<128x128xbf16>, vector<128x128xf32> -> vector<128x128xf32>
    %10 = arith.addf %6, %9 : vector<128x128xf32>
    %c0_9 = arith.constant 0 : index
    %c0_10 = arith.constant 0 : index
    %11 = vector.load %arg7[%c0_9, %c0_10] : memref<128x128xf32, #tpu.memory_space<vmem>>, vector<128x128xf32>
    tpu.vector_store %arg7[%c0_9, %c0_10], %10 {strides = array<i32>} : memref<128x128xf32, #tpu.memory_space<vmem>>, vector<128x128xf32>,
    %c0_i32_11 = arith.constant 0 : i32
    %12 = arith.cmpi eq, %arg1, %c0_i32_11 : i32
    %13 = arith.extui %12 : i1 to i32
    %c0_i32_12 = arith.constant 0 : i32
    %14 = arith.cmpi ne, %13, %c0_i32_12 : i32
    scf.if %14 {
      %c0_13 = arith.constant 0 : index
      %c0_14 = arith.constant 0 : index
      %15 = vector.load %arg7[%c0_13, %c0_14] : memref<128x128xf32, #tpu.memory_space<vmem>>, vector<128x128xf32>
      %c0_15 = arith.constant 0 : index
      %c0_16 = arith.constant 0 : index
      %16 = vector.load %arg5[%c0_15, %c0_16] : memref<1x128xf32, #tpu.memory_space<vmem>>, vector<1x128xf32>
      %17 = vector.broadcast %16 : vector<1x128xf32> to vector<128x128xf32>
      %18 = arith.addf %15, %17 : vector<128x128xf32>
      %c0_17 = arith.constant 0 : index
      %c0_18 = arith.constant 0 : index
      %19 = vector.load %arg6[%c0_17, %c0_18] : memref<128x128xf32, #tpu.memory_space<vmem>>, vector<128x128xf32>
      tpu.vector_store %arg6[%c0_17, %c0_18], %18 {strides = array<i32>} : memref<128x128xf32, #tpu.memory_space<vmem>>, vector<128x128xf32>,
    } else {
    }
    return
  }
  func.func @transform_0(%arg0: i32, %arg1: i32) -> (i32, i32) {
    %c0_i32 = arith.constant 0 : i32
    return %arg0, %arg1 : i32, i32
  }
  func.func @transform_1(%arg0: i32, %arg1: i32) -> (i32, i32) {
    %c0_i32 = arith.constant 0 : i32
    %c0_i32_0 = arith.constant 0 : i32
    return %arg1, %c0_i32 : i32, i32
  }
  func.func @transform_2(%arg0: i32, %arg1: i32) -> (i32, i32) {
    %c0_i32 = arith.constant 0 : i32
    %c0_i32_0 = arith.constant 0 : i32
    %c0_i32_1 = arith.constant 0 : i32
    return %c0_i32, %c0_i32_0 : i32, i32
  }
  func.func @transform_3(%arg0: i32, %arg1: i32) -> (i32, i32) {
    %c0_i32 = arith.constant 0 : i32
    %c0_i32_0 = arith.constant 0 : i32
    %c0_i32_1 = arith.constant 0 : i32
    return %c0_i32, %c0_i32_0 : i32, i32
  }
  func.func @transform_4(%arg0: i32, %arg1: i32) -> (i32, i32) {
    %c0_i32 = arith.constant 0 : i32
    %c0_i32_0 = arith.constant 0 : i32
    return %arg0, %c0_i32 : i32, i32
  }
}

</mosaic_0001>

<llo_original>
// kernel: tpu_custom_call.1
$region0: #{tpu_custom_call.1}
  #allocation0 [shape = 'u32[]', space=smem, size = 0x4, offset = 0x4, fixed_abs, tag = 'smem constant byte address 0x4 - core index']
  #allocation1 [shape = 'u32[144,128]{1,0:T(1,128)}', space=vmem, size = 0x12000, scoped, tag = 'internal scratch']
  #allocation2 [shape = 'f32[128,128]{1,0:T(8,128)}', space=vmem, size = 0x10000, scoped, tag = 'scratch operand']
  %s0 = inlined_call_operand.hbm [shape: bf16[128,128], index: 0, kind: input, shape index: {}]
  %s1 = inlined_call_operand.hbm [shape: f32[128,128], index: 1, kind: input, shape index: {}]
  %s2 = inlined_call_operand.hbm [shape: f32[128,128], index: 2, kind: input, shape index: {}]
  %s3 = inlined_call_operand.vmem [shape: f32[1,128], index: 3, kind: input, shape index: {}]
  %s4 = inlined_call_operand.hbm [shape: f32[128,128], index: 4, kind: output, shape index: {}]
  %s5 = sld [smem:[#allocation0]]
  $region46: #{tpu_custom_call.1} parent=0
    _
  %s7 = ssub.s32 1, %s5
  %s8 = scalar_select 0, %s7, %s5
  $region1: #{tpu_custom_call.1} parent=0
    #allocation3 [shape = 'u8[32768]{0}', space=vmem, size = 0x8000, scoped, tag = 'input window, operand 0, single buffered']
    #allocation4 [shape = 's32[1]{0}', space=sflag, size = 0x4, scoped, tag = 'scoped memory for tpu_custom_call.1']
    #allocation5 [shape = 's32[1]{0}', space=sflag, size = 0x4, scoped, tag = 'scoped memory for tpu_custom_call.1']
    #allocation6 [shape = 'u8[65536]{0}', space=vmem, size = 0x10000, scoped, tag = 'input window, operand 1, single buffered']
    #allocation7 [shape = 's32[1]{0}', space=sflag, size = 0x4, scoped, tag = 'scoped memory for tpu_custom_call.1']
    #allocation8 [shape = 'u8[65536]{0}', space=vmem, size = 0x10000, scoped, tag = 'input window, operand 2, single buffered']
    #allocation9 [shape = 'u8[65536]{0}', space=vmem, size = 0x10000, scoped, tag = 'output window, operand 0, single buffered']
    %9 = vsyncpa [#allocation4], 0
    %10 = vsyncpa [#allocation7], 0
    %11 = vsyncpa [#allocation5], 0
    // Predicated region
    $region2: #{tpu_custom_call.1} parent=1 // pred_check
      _
    $region3: #{tpu_custom_call.1} parent=1 // pred_check_branch
      %13 = sbr.rel (0) target = $region5
    $region4: #{tpu_custom_call.1} parent=1 // pred_region
      %s15 = ssub.s32 1024, 1024
      %16 = vsyncadd [#allocation4], %s15
      %s17 = sshll.u32 [#allocation3], 4
      %s18 = int_to_ptr.vmem [resolvable:$true] %s17
      %23 = dma.hbm_to_vmem [thread:$0]  %s0, 1024, %s18, [#allocation4], 64, 64, 4
    $region5: #{tpu_custom_call.1} parent=1 // pred_fallthru
      _
    // Predicated region
    $region6: #{tpu_custom_call.1} parent=1 // pred_check
      _
    $region7: #{tpu_custom_call.1} parent=1 // pred_check_branch
      %25 = sbr.rel (0) target = $region9
    $region8: #{tpu_custom_call.1} parent=1 // pred_region
      %s27 = ssub.s32 2048, 2048
      %28 = vsyncadd [#allocation7], %s27
      %s29 = sshll.u32 [#allocation6], 4
      %s30 = int_to_ptr.vmem [resolvable:$true] %s29
      %35 = dma.hbm_to_vmem [thread:$0]  %s1, 2048, %s30, [#allocation7], 128, 128, 8
    $region9: #{tpu_custom_call.1} parent=1 // pred_fallthru
      _
    // Predicated region
    $region10: #{tpu_custom_call.1} parent=1 // pred_check
      _
    $region11: #{tpu_custom_call.1} parent=1 // pred_check_branch
      %37 = sbr.rel (0) target = $region13
    $region12: #{tpu_custom_call.1} parent=1 // pred_region
      %s39 = ssub.s32 2048, 2048
      %40 = vsyncadd [#allocation7], %s39
      %s41 = sshll.u32 [#allocation8], 4
      %s42 = int_to_ptr.vmem [resolvable:$true] %s41
      %47 = dma.hbm_to_vmem [thread:$0]  %s2, 2048, %s42, [#allocation7], 128, 128, 8
    $region13: #{tpu_custom_call.1} parent=1 // pred_fallthru
      _
    // Predicated region
    $region14: #{tpu_custom_call.1} parent=1 // pred_check
      _
    $region15: #{tpu_custom_call.1} parent=1 // pred_check_branch
      %49 = sbr.rel (0) target = $region17
    $region16: #{tpu_custom_call.1} parent=1 // pred_region
      _
    $region17: #{tpu_custom_call.1} parent=1 // pred_fallthru
      _
    // Predicated region
    $region18: #{tpu_custom_call.1} parent=1 // pred_check
      _
    $region19: #{tpu_custom_call.1} parent=1 // pred_check_branch
      %51 = sbr.rel (0) target = $region21
    $region20: #{tpu_custom_call.1} parent=1 // pred_region
      %52 = dma.done [#allocation4], 1024
    $region21: #{tpu_custom_call.1} parent=1 // pred_fallthru
      _
    // Predicated region
    $region22: #{tpu_custom_call.1} parent=1 // pred_check
      _
    $region23: #{tpu_custom_call.1} parent=1 // pred_check_branch
      %54 = sbr.rel (0) target = $region25
    $region24: #{tpu_custom_call.1} parent=1 // pred_region
      %55 = dma.done [#allocation7], 2048
    $region25: #{tpu_custom_call.1} parent=1 // pred_fallthru
      _
    // Predicated region
    $region26: #{tpu_custom_call.1} parent=1 // pred_check
      _
    $region27: #{tpu_custom_call.1} parent=1 // pred_check_branch
      %57 = sbr.rel (0) target = $region29
    $region28: #{tpu_custom_call.1} parent=1 // pred_region
      %58 = dma.done [#allocation7], 2048
    $region29: #{tpu_custom_call.1} parent=1 // pred_fallthru
      _
    %p60 = scmp.eq.s32.totalorder 0, 0
    // Predicated region
    $region30: #{tpu_custom_call.1} parent=1 // pred_check
      %p61 = pneg %p60
    $region31: #{tpu_custom_call.1} parent=1 // pred_check_branch
      %63 = sbr.rel (%p61) target = $region33
    $region32: #{tpu_custom_call.1} parent=1 // pred_region
      %64 = vst [vmem:[#allocation2] sm:$0xff] 0.0
      %65 = vst [vmem:[#allocation2 + $0x8] sm:$0xff] 0.0
      %66 = vst [vmem:[#allocation2 + $0x10] sm:$0xff] 0.0
      %67 = vst [vmem:[#allocation2 + $0x18] sm:$0xff] 0.0
      %68 = vst [vmem:[#allocation2 + $0x20] sm:$0xff] 0.0
      %69 = vst [vmem:[#allocation2 + $0x28] sm:$0xff] 0.0
      %70 = vst [vmem:[#allocation2 + $0x30] sm:$0xff] 0.0
      %71 = vst [vmem:[#allocation2 + $0x38] sm:$0xff] 0.0
      %72 = vst [vmem:[#allocation2 + $0x40] sm:$0xff] 0.0
      %73 = vst [vmem:[#allocation2 + $0x48] sm:$0xff] 0.0
      %74 = vst [vmem:[#allocation2 + $0x50] sm:$0xff] 0.0
      %75 = vst [vmem:[#allocation2 + $0x58] sm:$0xff] 0.0
      %76 = vst [vmem:[#allocation2 + $0x60] sm:$0xff] 0.0
      %77 = vst [vmem:[#allocation2 + $0x68] sm:$0xff] 0.0
      %78 = vst [vmem:[#allocation2 + $0x70] sm:$0xff] 0.0
      %79 = vst [vmem:[#allocation2 + $0x78] sm:$0xff] 0.0
    $region33: #{tpu_custom_call.1} parent=1 // pred_fallthru
      _
    %v80 = vld [vmem:[#allocation6] sm:$0xff]
    %v81 = vld [vmem:[#allocation6 + $0x8] sm:$0xff]
    %v82 = vld [vmem:[#allocation6 + $0x10] sm:$0xff]
    %v83 = vld [vmem:[#allocation6 + $0x18] sm:$0xff]
    %v84 = vld [vmem:[#allocation6 + $0x20] sm:$0xff]
    %v85 = vld [vmem:[#allocation6 + $0x28] sm:$0xff]
    %v86 = vld [vmem:[#allocation6 + $0x30] sm:$0xff]
    %v87 = vld [vmem:[#allocation6 + $0x38] sm:$0xff]
    %v88 = vld [vmem:[#allocation6 + $0x40] sm:$0xff]
    %v89 = vld [vmem:[#allocation6 + $0x48] sm:$0xff]
    %v90 = vld [vmem:[#allocation6 + $0x50] sm:$0xff]
    %v91 = vld [vmem:[#allocation6 + $0x58] sm:$0xff]
    %v92 = vld [vmem:[#allocation6 + $0x60] sm:$0xff]
    %v93 = vld [vmem:[#allocation6 + $0x68] sm:$0xff]
    %v94 = vld [vmem:[#allocation6 + $0x70] sm:$0xff]
    %v95 = vld [vmem:[#allocation6 + $0x78] sm:$0xff]
    %v96 = vld [vmem:[#allocation8] sm:$0xff]
    %v97 = vld [vmem:[#allocation8 + $0x8] sm:$0xff]
    %v98 = vld [vmem:[#allocation8 + $0x10] sm:$0xff]
    %v99 = vld [vmem:[#allocation8 + $0x18] sm:$0xff]
    %v100 = vld [vmem:[#allocation8 + $0x20] sm:$0xff]
    %v101 = vld [vmem:[#allocation8 + $0x28] sm:$0xff]
    %v102 = vld [vmem:[#allocation8 + $0x30] sm:$0xff]
    %v103 = vld [vmem:[#allocation8 + $0x38] sm:$0xff]
    %v104 = vld [vmem:[#allocation8 + $0x40] sm:$0xff]
    %v105 = vld [vmem:[#allocation8 + $0x48] sm:$0xff]
    %v106 = vld [vmem:[#allocation8 + $0x50] sm:$0xff]
    %v107 = vld [vmem:[#allocation8 + $0x58] sm:$0xff]
    %v108 = vld [vmem:[#allocation8 + $0x60] sm:$0xff]
    %v109 = vld [vmem:[#allocation8 + $0x68] sm:$0xff]
    %v110 = vld [vmem:[#allocation8 + $0x70] sm:$0xff]
    %v111 = vld [vmem:[#allocation8 + $0x78] sm:$0xff]
    %112 = vmatprep.subr.mxu0 0.0
    %113 = vmatpush1.msra.mxu0 %v96
    %114 = vmatprep.subr.mxu0 0.0
    %115 = vmatpush1.msra.mxu0 %v97
    %116 = vmatprep.subr.mxu0 0.0
    %117 = vmatpush1.msra.mxu0 %v98
    %118 = vmatprep.subr.mxu0 0.0
    %119 = vmatpush1.msra.mxu0 %v99
    %120 = vmatprep.subr.mxu0 0.0
    %121 = vmatpush1.msra.mxu0 %v100
    %122 = vmatprep.subr.mxu0 0.0
    %123 = vmatpush1.msra.mxu0 %v101
    %124 = vmatprep.subr.mxu0 0.0
    %125 = vmatpush1.msra.mxu0 %v102
    %126 = vmatprep.subr.mxu0 0.0
    %127 = vmatpush1.msra.mxu0 %v103
    %128 = vmatprep.subr.mxu0 0.0
    %129 = vmatpush1.msra.mxu0 %v104
    %130 = vmatprep.subr.mxu0 0.0
    %131 = vmatpush1.msra.mxu0 %v105
    %132 = vmatprep.subr.mxu0 0.0
    %133 = vmatpush1.msra.mxu0 %v106
    %134 = vmatprep.subr.mxu0 0.0
    %135 = vmatpush1.msra.mxu0 %v107
    %136 = vmatprep.subr.mxu0 0.0
    %137 = vmatpush1.msra.mxu0 %v108
    %138 = vmatprep.subr.mxu0 0.0
    %139 = vmatpush1.msra.mxu0 %v109
    %140 = vmatprep.subr.mxu0 0.0
    %141 = vmatpush1.msra.mxu0 %v110
    %142 = vmatprep.subr.mxu0 0.0
    %143 = vmatpush1.msra.mxu0 %v111
    %144 = vmatprep.subr.mxu0 0.0
    %145 = vmatpush1.msra.mxu0 0.0
    %146 = vmatprep.subr.mxu0 0.0
    %147 = vmatpush1.msra.mxu0 0.0
    %148 = vmatprep.subr.mxu0 0.0
    %149 = vmatpush1.msra.mxu0 0.0
    %150 = vmatprep.subr.mxu0 0.0
    %151 = vmatpush1.msra.mxu0 0.0
    %152 = vmatprep.subr.mxu0 0.0
    %153 = vmatpush1.msra.mxu0 0.0
    %154 = vmatprep.subr.mxu0 0.0
    %155 = vmatpush1.msra.mxu0 0.0
    %156 = vmatprep.subr.mxu0 0.0
    %157 = vmatpush1.msra.mxu0 0.0
    %158 = vmatprep.subr.mxu0 0.0
    %159 = vmatpush1.msra.mxu0 0.0
    %160 = vmatprep.subr.mxu0 0.0
    %161 = vmatpush1.msra.mxu0 0.0
    %162 = vmatprep.subr.mxu0 0.0
    %163 = vmatpush1.msra.mxu0 0.0
    %164 = vmatprep.subr.mxu0 0.0
    %165 = vmatpush1.msra.mxu0 0.0
    %166 = vmatprep.subr.mxu0 0.0
    %167 = vmatpush1.msra.mxu0 0.0
    %168 = vmatprep.subr.mxu0 0.0
    %169 = vmatpush1.msra.mxu0 0.0
    %170 = vmatprep.subr.mxu0 0.0
    %171 = vmatpush1.msra.mxu0 0.0
    %172 = vmatprep.subr.mxu0 0.0
    %173 = vmatpush1.msra.mxu0 0.0
    %174 = vmatprep.subr.mxu0 0.0
    %175 = vmatpush1.msra.mxu0 0.0
    %176 = vmatprep.mubr.f32.mxu0 0.0
    %177 = vmatmul.mubr.f32.gmra.mrb[0].mxu0 %v80
    %v178 = vpop.f32.mrb[0].mxu0
    %v179 = vadd.f32 0.0, %v178
    %v180 = vpop.f32.mrb[0].mxu0
    %181 = vmatprep.mubr.f32.mxu0 0.0
    %182 = vmatmul.mubr.f32.gmra.mrb[0].mxu0 %v81
    %v183 = vpop.f32.mrb[0].mxu0
    %v184 = vadd.f32 0.0, %v183
    %v185 = vpop.f32.mrb[0].mxu0
    %186 = vmatprep.mubr.f32.mxu0 0.0
    %187 = vmatmul.mubr.f32.gmra.mrb[0].mxu0 %v82
    %v188 = vpop.f32.mrb[0].mxu0
    %v189 = vadd.f32 0.0, %v188
    %v190 = vpop.f32.mrb[0].mxu0
    %191 = vmatprep.mubr.f32.mxu0 0.0
    %192 = vmatmul.mubr.f32.gmra.mrb[0].mxu0 %v83
    %v193 = vpop.f32.mrb[0].mxu0
    %v194 = vadd.f32 0.0, %v193
    %v195 = vpop.f32.mrb[0].mxu0
    %196 = vmatprep.mubr.f32.mxu0 0.0
    %197 = vmatmul.mubr.f32.gmra.mrb[0].mxu0 %v84
    %v198 = vpop.f32.mrb[0].mxu0
    %v199 = vadd.f32 0.0, %v198
    %v200 = vpop.f32.mrb[0].mxu0
    %201 = vmatprep.mubr.f32.mxu0 0.0
    %202 = vmatmul.mubr.f32.gmra.mrb[0].mxu0 %v85
    %v203 = vpop.f32.mrb[0].mxu0
    %v204 = vadd.f32 0.0, %v203
    %v205 = vpop.f32.mrb[0].mxu0
    %206 = vmatprep.mubr.f32.mxu0 0.0
    %207 = vmatmul.mubr.f32.gmra.mrb[0].mxu0 %v86
    %v208 = vpop.f32.mrb[0].mxu0
    %v209 = vadd.f32 0.0, %v208
    %v210 = vpop.f32.mrb[0].mxu0
    %211 = vmatprep.mubr.f32.mxu0 0.0
    %212 = vmatmul.mubr.f32.gmra.mrb[0].mxu0 %v87
    %v213 = vpop.f32.mrb[0].mxu0
    %v214 = vadd.f32 0.0, %v213
    %v215 = vpop.f32.mrb[0].mxu0
    %216 = vmatprep.mubr.f32.mxu0 0.0
    %217 = vmatmul.mubr.f32.gmra.mrb[0].mxu0 %v88
    %v218 = vpop.f32.mrb[0].mxu0
    %v219 = vadd.f32 0.0, %v218
    %v220 = vpop.f32.mrb[0].mxu0
    %221 = vmatprep.mubr.f32.mxu0 0.0
    %222 = vmatmul.mubr.f32.gmra.mrb[0].mxu0 %v89
    %v223 = vpop.f32.mrb[0].mxu0
    %v224 = vadd.f32 0.0, %v223
    %v225 = vpop.f32.mrb[0].mxu0
    %226 = vmatprep.mubr.f32.mxu0 0.0
    %227 = vmatmul.mubr.f32.gmra.mrb[0].mxu0 %v90
    %v228 = vpop.f32.mrb[0].mxu0
    %v229 = vadd.f32 0.0, %v228
    %v230 = vpop.f32.mrb[0].mxu0
    %231 = vmatprep.mubr.f32.mxu0 0.0
    %232 = vmatmul.mubr.f32.gmra.mrb[0].mxu0 %v91
    %v233 = vpop.f32.mrb[0].mxu0
    %v234 = vadd.f32 0.0, %v233
    %v235 = vpop.f32.mrb[0].mxu0
    %236 = vmatprep.mubr.f32.mxu0 0.0
    %237 = vmatmul.mubr.f32.gmra.mrb[0].mxu0 %v92
    %v238 = vpop.f32.mrb[0].mxu0
    %v239 = vadd.f32 0.0, %v238
    %v240 = vpop.f32.mrb[0].mxu0
    %241 = vmatprep.mubr.f32.mxu0 0.0
    %242 = vmatmul.mubr.f32.gmra.mrb[0].mxu0 %v93
    %v243 = vpop.f32.mrb[0].mxu0
    %v244 = vadd.f32 0.0, %v243
    %v245 = vpop.f32.mrb[0].mxu0
    %246 = vmatprep.mubr.f32.mxu0 0.0
    %247 = vmatmul.mubr.f32.gmra.mrb[0].mxu0 %v94
    %v248 = vpop.f32.mrb[0].mxu0
    %v249 = vadd.f32 0.0, %v248
    %v250 = vpop.f32.mrb[0].mxu0
    %251 = vmatprep.mubr.f32.mxu0 0.0
    %252 = vmatmul.mubr.f32.gmra.mrb[0].mxu0 %v95
    %v253 = vpop.f32.mrb[0].mxu0
    %v254 = vadd.f32 0.0, %v253
    %v255 = vpop.f32.mrb[0].mxu0
    %256 = vdwg.mxu0
    %v257 = vld [vmem:[#allocation2] sm:$0xff]
    %v258 = vld [vmem:[#allocation2 + $0x8] sm:$0xff]
    %v259 = vld [vmem:[#allocation2 + $0x10] sm:$0xff]
    %v260 = vld [vmem:[#allocation2 + $0x18] sm:$0xff]
    %v261 = vld [vmem:[#allocation2 + $0x20] sm:$0xff]
    %v262 = vld [vmem:[#allocation2 + $0x28] sm:$0xff]
    %v263 = vld [vmem:[#allocation2 + $0x30] sm:$0xff]
    %v264 = vld [vmem:[#allocation2 + $0x38] sm:$0xff]
    %v265 = vld [vmem:[#allocation2 + $0x40] sm:$0xff]
    %v266 = vld [vmem:[#allocation2 + $0x48] sm:$0xff]
    %v267 = vld [vmem:[#allocation2 + $0x50] sm:$0xff]
    %v268 = vld [vmem:[#allocation2 + $0x58] sm:$0xff]
    %v269 = vld [vmem:[#allocation2 + $0x60] sm:$0xff]
    %v270 = vld [vmem:[#allocation2 + $0x68] sm:$0xff]
    %v271 = vld [vmem:[#allocation2 + $0x70] sm:$0xff]
    %v272 = vld [vmem:[#allocation2 + $0x78] sm:$0xff]
    %v273 = vld [vmem:[#allocation3] sm:$0xf]
    %v274 = vld [vmem:[#allocation3 + $0x4] sm:$0xf]
    %v275 = vld [vmem:[#allocation3 + $0x8] sm:$0xf]
    %v276 = vld [vmem:[#allocation3 + $0xc] sm:$0xf]
    %v277 = vld [vmem:[#allocation3 + $0x10] sm:$0xf]
    %v278 = vld [vmem:[#allocation3 + $0x14] sm:$0xf]
    %v279 = vld [vmem:[#allocation3 + $0x18] sm:$0xf]
    %v280 = vld [vmem:[#allocation3 + $0x1c] sm:$0xf]
    %v281 = vld [vmem:[#allocation3 + $0x20] sm:$0xf]
    %v282 = vld [vmem:[#allocation3 + $0x24] sm:$0xf]
    %v283 = vld [vmem:[#allocation3 + $0x28] sm:$0xf]
    %v284 = vld [vmem:[#allocation3 + $0x2c] sm:$0xf]
    %v285 = vld [vmem:[#allocation3 + $0x30] sm:$0xf]
    %v286 = vld [vmem:[#allocation3 + $0x34] sm:$0xf]
    %v287 = vld [vmem:[#allocation3 + $0x38] sm:$0xf]
    %v288 = vld [vmem:[#allocation3 + $0x3c] sm:$0xf]
    %v289 = vpack.c.bf16 %v184, %v179
    %v290 = vpack.c.bf16 %v194, %v189
    %v291 = vpack.c.bf16 %v204, %v199
    %v292 = vpack.c.bf16 %v214, %v209
    %v293 = vpack.c.bf16 %v224, %v219
    %v294 = vpack.c.bf16 %v234, %v229
    %v295 = vpack.c.bf16 %v244, %v239
    %v296 = vpack.c.bf16 %v254, %v249
    %v313 = vunpack.c.l.b16 %v273
    %v314 = vunpack.c.l.b16 %v274
    %v315 = vunpack.c.l.b16 %v275
    %v316 = vunpack.c.l.b16 %v276
    %v317 = vunpack.c.l.b16 %v277
    %v318 = vunpack.c.l.b16 %v278
    %v319 = vunpack.c.l.b16 %v279
    %v320 = vunpack.c.l.b16 %v280
    %v321 = vunpack.c.l.b16 %v281
    %v322 = vunpack.c.l.b16 %v282
    %v323 = vunpack.c.l.b16 %v283
    %v324 = vunpack.c.l.b16 %v284
    %v325 = vunpack.c.l.b16 %v285
    %v326 = vunpack.c.l.b16 %v286
    %v327 = vunpack.c.l.b16 %v287
    %v328 = vunpack.c.l.b16 %v288
    %v329 = vpack.c.b16 %v314, %v313
    %v330 = vpack.c.b16 %v316, %v315
    %v331 = vpack.c.b16 %v318, %v317
    %v332 = vpack.c.b16 %v320, %v319
    %v333 = vpack.c.b16 %v322, %v321
    %v334 = vpack.c.b16 %v324, %v323
    %v335 = vpack.c.b16 %v326, %v325
    %v336 = vpack.c.b16 %v328, %v327
    %345 = vmatprep.subr.bf16.mxu0 0
    %346 = vmatpush1.bf16.msra.mxu0 %v289
    %347 = vmatprep.subr.bf16.mxu0 0
    %348 = vmatpush1.bf16.msra.mxu0 %v290
    %349 = vmatprep.subr.bf16.mxu0 0
    %350 = vmatpush1.bf16.msra.mxu0 %v291
    %351 = vmatprep.subr.bf16.mxu0 0
    %352 = vmatpush1.bf16.msra.mxu0 %v292
    %353 = vmatprep.subr.bf16.mxu0 0
    %354 = vmatpush1.bf16.msra.mxu0 %v293
    %355 = vmatprep.subr.bf16.mxu0 0
    %356 = vmatpush1.bf16.msra.mxu0 %v294
    %357 = vmatprep.subr.bf16.mxu0 0
    %358 = vmatpush1.bf16.msra.mxu0 %v295
    %359 = vmatprep.subr.bf16.mxu0 0
    %360 = vmatpush1.bf16.msra.mxu0 %v296
    %361 = vmatprep.subr.bf16.mxu0 0
    %362 = vmatpush1.bf16.msra.mxu0 0
    %363 = vmatprep.subr.bf16.mxu0 0
    %364 = vmatpush1.bf16.msra.mxu0 0
    %365 = vmatprep.subr.bf16.mxu0 0
    %366 = vmatpush1.bf16.msra.mxu0 0
    %367 = vmatprep.subr.bf16.mxu0 0
    %368 = vmatpush1.bf16.msra.mxu0 0
    %369 = vmatprep.subr.bf16.mxu0 0
    %370 = vmatpush1.bf16.msra.mxu0 0
    %371 = vmatprep.subr.bf16.mxu0 0
    %372 = vmatpush1.bf16.msra.mxu0 0
    %373 = vmatprep.subr.bf16.mxu0 0
    %374 = vmatpush1.bf16.msra.mxu0 0
    %375 = vmatprep.subr.bf16.mxu0 0
    %376 = vmatpush1.bf16.msra.mxu0 0
    %377 = vmatprep.mubr.bf16.mxu0 0
    %378 = vmatmul.mubr.bf16.gmra.mrb[0].mxu0 %v329
    %v379 = vpop.f32.mrb[0].mxu0
    %v380 = vadd.f32 0.0, %v379
    %v381 = vpop.f32.mrb[0].mxu0
    %v382 = vpop.f32.mrb[0].mxu0
    %v383 = vadd.f32 0.0, %v382
    %v384 = vpop.f32.mrb[0].mxu0
    %385 = vmatprep.mubr.bf16.mxu0 0
    %386 = vmatmul.mubr.bf16.gmra.mrb[0].mxu0 %v330
    %v387 = vpop.f32.mrb[0].mxu0
    %v388 = vadd.f32 0.0, %v387
    %v389 = vpop.f32.mrb[0].mxu0
    %v390 = vpop.f32.mrb[0].mxu0
    %v391 = vadd.f32 0.0, %v390
    %v392 = vpop.f32.mrb[0].mxu0
    %393 = vmatprep.mubr.bf16.mxu0 0
    %394 = vmatmul.mubr.bf16.gmra.mrb[0].mxu0 %v331
    %v395 = vpop.f32.mrb[0].mxu0
    %v396 = vadd.f32 0.0, %v395
    %v397 = vpop.f32.mrb[0].mxu0
    %v398 = vpop.f32.mrb[0].mxu0
    %v399 = vadd.f32 0.0, %v398
    %v400 = vpop.f32.mrb[0].mxu0
    %401 = vmatprep.mubr.bf16.mxu0 0
    %402 = vmatmul.mubr.bf16.gmra.mrb[0].mxu0 %v332
    %v403 = vpop.f32.mrb[0].mxu0
    %v404 = vadd.f32 0.0, %v403
    %v405 = vpop.f32.mrb[0].mxu0
    %v406 = vpop.f32.mrb[0].mxu0
    %v407 = vadd.f32 0.0, %v406
    %v408 = vpop.f32.mrb[0].mxu0
    %409 = vmatprep.mubr.bf16.mxu0 0
    %410 = vmatmul.mubr.bf16.gmra.mrb[0].mxu0 %v333
    %v411 = vpop.f32.mrb[0].mxu0
    %v412 = vadd.f32 0.0, %v411
    %v413 = vpop.f32.mrb[0].mxu0
    %v414 = vpop.f32.mrb[0].mxu0
    %v415 = vadd.f32 0.0, %v414
    %v416 = vpop.f32.mrb[0].mxu0
    %417 = vmatprep.mubr.bf16.mxu0 0
    %418 = vmatmul.mubr.bf16.gmra.mrb[0].mxu0 %v334
    %v419 = vpop.f32.mrb[0].mxu0
    %v420 = vadd.f32 0.0, %v419
    %v421 = vpop.f32.mrb[0].mxu0
    %v422 = vpop.f32.mrb[0].mxu0
    %v423 = vadd.f32 0.0, %v422
    %v424 = vpop.f32.mrb[0].mxu0
    %425 = vmatprep.mubr.bf16.mxu0 0
    %426 = vmatmul.mubr.bf16.gmra.mrb[0].mxu0 %v335
    %v427 = vpop.f32.mrb[0].mxu0
    %v428 = vadd.f32 0.0, %v427
    %v429 = vpop.f32.mrb[0].mxu0
    %v430 = vpop.f32.mrb[0].mxu0
    %v431 = vadd.f32 0.0, %v430
    %v432 = vpop.f32.mrb[0].mxu0
    %433 = vmatprep.mubr.bf16.mxu0 0
    %434 = vmatmul.mubr.bf16.gmra.mrb[0].mxu0 %v336
    %v435 = vpop.f32.mrb[0].mxu0
    %v436 = vadd.f32 0.0, %v435
    %v437 = vpop.f32.mrb[0].mxu0
    %v438 = vpop.f32.mrb[0].mxu0
    %v439 = vadd.f32 0.0, %v438
    %v440 = vpop.f32.mrb[0].mxu0
    %441 = vdwg.mxu0
    %v442 = vadd.f32 %v257, %v380
    %v443 = vadd.f32 %v258, %v383
    %v444 = vadd.f32 %v259, %v388
    %v445 = vadd.f32 %v260, %v391
    %v446 = vadd.f32 %v261, %v396
    %v447 = vadd.f32 %v262, %v399
    %v448 = vadd.f32 %v263, %v404
    %v449 = vadd.f32 %v264, %v407
    %v450 = vadd.f32 %v265, %v412
    %v451 = vadd.f32 %v266, %v415
    %v452 = vadd.f32 %v267, %v420
    %v453 = vadd.f32 %v268, %v423
    %v454 = vadd.f32 %v269, %v428
    %v455 = vadd.f32 %v270, %v431
    %v456 = vadd.f32 %v271, %v436
    %v457 = vadd.f32 %v272, %v439
    %458 = vst [vmem:[#allocation2] sm:$0xff] %v442
    %459 = vst [vmem:[#allocation2 + $0x8] sm:$0xff] %v443
    %460 = vst [vmem:[#allocation2 + $0x10] sm:$0xff] %v444
    %461 = vst [vmem:[#allocation2 + $0x18] sm:$0xff] %v445
    %462 = vst [vmem:[#allocation2 + $0x20] sm:$0xff] %v446
    %463 = vst [vmem:[#allocation2 + $0x28] sm:$0xff] %v447
    %464 = vst [vmem:[#allocation2 + $0x30] sm:$0xff] %v448
    %465 = vst [vmem:[#allocation2 + $0x38] sm:$0xff] %v449
    %466 = vst [vmem:[#allocation2 + $0x40] sm:$0xff] %v450
    %467 = vst [vmem:[#allocation2 + $0x48] sm:$0xff] %v451
    %468 = vst [vmem:[#allocation2 + $0x50] sm:$0xff] %v452
    %469 = vst [vmem:[#allocation2 + $0x58] sm:$0xff] %v453
    %470 = vst [vmem:[#allocation2 + $0x60] sm:$0xff] %v454
    %471 = vst [vmem:[#allocation2 + $0x68] sm:$0xff] %v455
    %472 = vst [vmem:[#allocation2 + $0x70] sm:$0xff] %v456
    %473 = vst [vmem:[#allocation2 + $0x78] sm:$0xff] %v457
    // Predicated region
    $region34: #{tpu_custom_call.1} parent=1 // pred_check
      %p474 = pneg %p60
    $region35: #{tpu_custom_call.1} parent=1 // pred_check_branch
      %476 = sbr.rel (%p474) target = $region37
    $region36: #{tpu_custom_call.1} parent=1 // pred_region
      %v477 = vld [vmem:[#allocation2] sm:$0xff]
      %v478 = vld [vmem:[#allocation2 + $0x8] sm:$0xff]
      %v479 = vld [vmem:[#allocation2 + $0x10] sm:$0xff]
      %v480 = vld [vmem:[#allocation2 + $0x18] sm:$0xff]
      %v481 = vld [vmem:[#allocation2 + $0x20] sm:$0xff]
      %v482 = vld [vmem:[#allocation2 + $0x28] sm:$0xff]
      %v483 = vld [vmem:[#allocation2 + $0x30] sm:$0xff]
      %v484 = vld [vmem:[#allocation2 + $0x38] sm:$0xff]
      %v485 = vld [vmem:[#allocation2 + $0x40] sm:$0xff]
      %v486 = vld [vmem:[#allocation2 + $0x48] sm:$0xff]
      %v487 = vld [vmem:[#allocation2 + $0x50] sm:$0xff]
      %v488 = vld [vmem:[#allocation2 + $0x58] sm:$0xff]
      %v489 = vld [vmem:[#allocation2 + $0x60] sm:$0xff]
      %v490 = vld [vmem:[#allocation2 + $0x68] sm:$0xff]
      %v491 = vld [vmem:[#allocation2 + $0x70] sm:$0xff]
      %v492 = vld [vmem:[#allocation2 + $0x78] sm:$0xff]
      %v493 = vld [vmem:[%s3] sm:$0x1]
      %v495 = vlaneseq
      %v496 = vshrl.u32 %v495, 7
      %v497 = vsub.s32 0, %v496
      %v498 = vrot.slane %v493, %v497
      %v500 = vadd.f32 %v477, %v498
      %v501 = vadd.f32 %v478, %v498
      %v502 = vadd.f32 %v479, %v498
      %v503 = vadd.f32 %v480, %v498
      %v504 = vadd.f32 %v481, %v498
      %v505 = vadd.f32 %v482, %v498
      %v506 = vadd.f32 %v483, %v498
      %v507 = vadd.f32 %v484, %v498
      %v508 = vadd.f32 %v485, %v498
      %v509 = vadd.f32 %v486, %v498
      %v510 = vadd.f32 %v487, %v498
      %v511 = vadd.f32 %v488, %v498
      %v512 = vadd.f32 %v489, %v498
      %v513 = vadd.f32 %v490, %v498
      %v514 = vadd.f32 %v491, %v498
      %v515 = vadd.f32 %v492, %v498
      %516 = vst [vmem:[#allocation9] sm:$0xff] %v500
      %517 = vst [vmem:[#allocation9 + $0x8] sm:$0xff] %v501
      %518 = vst [vmem:[#allocation9 + $0x10] sm:$0xff] %v502
      %519 = vst [vmem:[#allocation9 + $0x18] sm:$0xff] %v503
      %520 = vst [vmem:[#allocation9 + $0x20] sm:$0xff] %v504
      %521 = vst [vmem:[#allocation9 + $0x28] sm:$0xff] %v505
      %522 = vst [vmem:[#allocation9 + $0x30] sm:$0xff] %v506
      %523 = vst [vmem:[#allocation9 + $0x38] sm:$0xff] %v507
      %524 = vst [vmem:[#allocation9 + $0x40] sm:$0xff] %v508
      %525 = vst [vmem:[#allocation9 + $0x48] sm:$0xff] %v509
      %526 = vst [vmem:[#allocation9 + $0x50] sm:$0xff] %v510
      %527 = vst [vmem:[#allocation9 + $0x58] sm:$0xff] %v511
      %528 = vst [vmem:[#allocation9 + $0x60] sm:$0xff] %v512
      %529 = vst [vmem:[#allocation9 + $0x68] sm:$0xff] %v513
      %530 = vst [vmem:[#allocation9 + $0x70] sm:$0xff] %v514
      %531 = vst [vmem:[#allocation9 + $0x78] sm:$0xff] %v515
    $region37: #{tpu_custom_call.1} parent=1 // pred_fallthru
      _
    // Predicated region
    $region38: #{tpu_custom_call.1} parent=1 // pred_check
      _
    $region39: #{tpu_custom_call.1} parent=1 // pred_check_branch
      %533 = sbr.rel (0) target = $region41
    $region40: #{tpu_custom_call.1} parent=1 // pred_region
      %s535 = ssub.s32 2048, 2048
      %536 = vsyncadd [#allocation5], %s535
      %s537 = sshll.u32 [#allocation9], 4
      %s538 = int_to_ptr.vmem [resolvable:$true] %s537
      %543 = dma.vmem_to_hbm [thread:$0]  %s538, 2048, %s4, [#allocation5], 128, 128, 8
    $region41: #{tpu_custom_call.1} parent=1 // pred_fallthru
      _
    // Predicated region
    $region42: #{tpu_custom_call.1} parent=1 // pred_check
      _
    $region43: #{tpu_custom_call.1} parent=1 // pred_check_branch
      %545 = sbr.rel (0) target = $region45
    $region44: #{tpu_custom_call.1} parent=1 // pred_region
      %546 = dma.done [#allocation5], 2048
    $region45: #{tpu_custom_call.1} parent=1 // pred_fallthru
      _
    %547 = vsyncpa [#allocation4], 1
    %548 = vsyncpa [#allocation7], 1
    %549 = vsyncpa [#allocation5], 1

</llo_original>
